<compile_context>
chip_gen: v7x
topology: tpu7x:2x2x1
jax: 0.10.0
libtpu: 0.0.40
codegen_flags: <defaults>
</compile_context>

<pallas_src>
import math
import jax
import jax.numpy as jnp
from jax.experimental import pallas as pl
from jax.experimental.pallas import tpu as pltpu


def _round_up(x: int, m: int) -> int:
    return ((x + m - 1) // m) * m


def mlp_kernel(x_ref, w1_ref, b1_ref, w2_ref, b2_ref, o_ref):
    # hidden = relu(x @ W1 + b1)   -- f32 accumulation on the MXU
    h = jnp.dot(x_ref[...], w1_ref[...], preferred_element_type=jnp.float32)
    h = jnp.maximum(h + b1_ref[...], 0.0)          # b1 (1, hid) broadcasts over rows
    # out = hidden @ W2 + b2  (h stays f32; low-precision W2 is promoted, not h rounded)
    y = jnp.dot(h, w2_ref[...], preferred_element_type=jnp.float32)
    o_ref[...] = (y + b2_ref[...]).astype(o_ref.dtype)


def choose_row_tile(n_rows: int, max_tile: int = 1024, min_tile: int = 8) -> int:
    """Big tiles amortize per-grid-step overhead; keep >=2 grid steps so the
    'parallel' grid axis can be sharded across v7x's two TensorCores."""
    tile = min(max_tile, _round_up(pl.cdiv(n_rows, 2), min_tile))
    return max(tile, min_tile)


def prediction_model_forward(x_data, w1, b1, w2, b2, *, row_tile=None,
                             compute_dtype=None):
    """Apply Linear->ReLU->Linear row-wise to packed data [N, input_size]."""
    N, in_sz = x_data.shape
    hid_sz = w1.shape[1]
    out_sz = w2.shape[1]
    out_dtype = x_data.dtype                      # keep caller's dtype for the result

    if row_tile is None:
        row_tile = choose_row_tile(N)
    row_tile = _round_up(row_tile, 8)             # sublane alignment
    grid_steps = pl.cdiv(N, row_tile)
    n_pad = grid_steps * row_tile

    # Lane-dense output: pad the output columns up to a multiple of 128.
    out_pad = _round_up(out_sz, 128)

    # Optional low-precision inputs/weights (v6e/v7x: bf16 halves HBM reads;
    # accumulation stays f32 inside the kernel).
    if compute_dtype is not None:
        x_data = x_data.astype(compute_dtype)
        w1 = w1.astype(compute_dtype)
        w2 = w2.astype(compute_dtype)

    # Internal row padding (padded rows are independent garbage, sliced off).
    if n_pad != N:
        x_data = jnp.pad(x_data, ((0, n_pad - N), (0, 0)))
    # Column padding of W2 / b2 with zeros (padded output columns sliced off).
    if out_pad != out_sz:
        w2 = jnp.pad(w2, ((0, 0), (0, out_pad - out_sz)))
        b2 = jnp.pad(b2, ((0, 0), (0, out_pad - out_sz)))

    x_item = jnp.dtype(x_data.dtype).itemsize
    w_item = jnp.dtype(w1.dtype).itemsize
    o_item = jnp.dtype(out_dtype).itemsize
    cost = pl.CostEstimate(
        flops=2 * n_pad * (in_sz * hid_sz + hid_sz * out_pad),
        transcendentals=0,
        bytes_accessed=(n_pad * in_sz * x_item            # x reads
                        + (w1.size + w2.size) * w_item    # weights (resident)
                        + (b1.size + b2.size) * 4         # biases (f32)
                        + n_pad * out_pad * o_item),      # output writes
    )

    y = pl.pallas_call(
        mlp_kernel,
        out_shape=jax.ShapeDtypeStruct((n_pad, out_pad), out_dtype),
        grid_spec=pltpu.PrefetchScalarGridSpec(
            num_scalar_prefetch=0,
            grid=(grid_steps,),
            in_specs=[
                pl.BlockSpec((row_tile, in_sz), lambda i: (i, 0)),    # x rows (streamed)
                pl.BlockSpec((in_sz, hid_sz), lambda i: (0, 0)),      # W1 (resident)
                pl.BlockSpec((1, hid_sz), lambda i: (0, 0)),          # b1
                pl.BlockSpec((hid_sz, out_pad), lambda i: (0, 0)),    # W2 (resident, lane-padded)
                pl.BlockSpec((1, out_pad), lambda i: (0, 0)),         # b2
            ],
            out_specs=pl.BlockSpec((row_tile, out_pad), lambda i: (i, 0)),
        ),
        compiler_params=pltpu.CompilerParams(
            dimension_semantics=("parallel",)),
        cost_estimate=cost,
    )(x_data, w1, b1, w2, b2)

    return y[:N, :out_sz]


def init_linear_params(key, fan_in, fan_out, dtype=jnp.float32):
    """Deterministic init matching torch.nn.Linear: U(-1/sqrt(fan_in), +1/sqrt(fan_in)).
    Weight returned already transposed to [fan_in, fan_out]."""
    kw, kb = jax.random.split(key)
    bound = 1.0 / math.sqrt(fan_in)
    w = jax.random.uniform(kw, (fan_in, fan_out), dtype, minval=-bound, maxval=bound)
    b = jax.random.uniform(kb, (1, fan_out), dtype, minval=-bound, maxval=bound)
    return w, b


if __name__ == "__main__":
    key = jax.random.PRNGKey(0)
    k_x, k_l1, k_l2 = jax.random.split(key, 3)

    input_size, hidden_size, output_size = 16, 32, 8
    # Packed-sequence "data" tensor: total timesteps across all sequences.
    # (e.g. 4 sequences of lengths 24, 18, 14, 8 -> 64 packed rows; the kernel
    # no longer requires N to be tile-aligned.)
    seq_lens = (24, 18, 14, 8)
    n_packed = sum(seq_lens)
    x_data = jax.random.normal(k_x, (n_packed, input_size), jnp.float32)

    w1, b1 = init_linear_params(k_l1, input_size, hidden_size)
    w2, b2 = init_linear_params(k_l2, hidden_size, output_size)

    # Reference (plain JAX, f32)
    ref = jnp.maximum(x_data @ w1 + b1, 0.0) @ w2 + b2

    # f32 path (matches the PyTorch f32 reference)
    y = prediction_model_forward(x_data, w1, b1, w2, b2)
    y = jax.block_until_ready(y)
    assert y.shape == (n_packed, output_size)
    assert jnp.allclose(y, ref, atol=1e-5, rtol=1e-5)

    # bf16 inputs/weights (v6e/v7x mem-bound path: halves HBM read bytes;
    # accumulation stays f32, so error vs. the f32 reference is tiny).
    y_bf16 = prediction_model_forward(x_data, w1, b1, w2, b2,
                                      compute_dtype=jnp.bfloat16)
    y_bf16 = jax.block_until_ready(y_bf16)
    assert y_bf16.shape == (n_packed, output_size)
    assert jnp.allclose(y_bf16, ref, atol=5e-2, rtol=5e-2)

    # repack_like: the output shares the PackedSequence metadata (batch_sizes,
    # sorted_indices) of the input — metadata-only, no compute needed here.
    print("KERNEL_OK")
</pallas_src>

<mosaic_0001>
module attributes {stable_mosaic.version = 11 : i64} {
  func.func @mlp_kernel(%arg0: i32, %arg1: memref<32x16xf32, #tpu.memory_space<vmem>>, %arg2: memref<16x32xf32, #tpu.memory_space<vmem>>, %arg3: memref<1x32xf32, #tpu.memory_space<vmem>>, %arg4: memref<32x128xf32, #tpu.memory_space<vmem>>, %arg5: memref<1x128xf32, #tpu.memory_space<vmem>>, %arg6: memref<32x128xf32, #tpu.memory_space<vmem>>) attributes {dimension_semantics = [#tpu.dimension_semantics<parallel>], iteration_bounds = array<i64: 2>, scalar_prefetch = 0 : i64, scratch_operands = 0 : i64, tpu.core_type = #tpu.core_type<tc>, window_params = [{transform_indices = @transform_0, window_bounds = array<i64: 32, 16>}, {pipeline_mode = #tpu.pipeline_mode<synchronous>, transform_indices = @transform_1, window_bounds = array<i64: 16, 32>}, {pipeline_mode = #tpu.pipeline_mode<synchronous>, transform_indices = @transform_2, window_bounds = array<i64: 1, 32>}, {pipeline_mode = #tpu.pipeline_mode<synchronous>, transform_indices = @transform_3, window_bounds = array<i64: 32, 128>}, {pipeline_mode = #tpu.pipeline_mode<synchronous>, transform_indices = @transform_4, window_bounds = array<i64: 1, 128>}, {transform_indices = @transform_5, window_bounds = array<i64: 32, 128>}]} {
    %c0 = arith.constant 0 : index
    %c0_0 = arith.constant 0 : index
    %0 = vector.load %arg1[%c0, %c0_0] : memref<32x16xf32, #tpu.memory_space<vmem>>, vector<32x16xf32>
    %c0_1 = arith.constant 0 : index
    %c0_2 = arith.constant 0 : index
    %1 = vector.load %arg2[%c0_1, %c0_2] : memref<16x32xf32, #tpu.memory_space<vmem>>, vector<16x32xf32>
    %cst = arith.constant dense<0.000000e+00> : vector<32x32xf32>
    %2 = tpu.matmul %0, %1, %cst {dimension_numbers = #tpu.dot_dimension_numbers<[1], [0], [0], [1], [0, 0, 1, 1], [], []>} : vector<32x16xf32>, vector<16x32xf32>, vector<32x32xf32> -> vector<32x32xf32>
    %c0_3 = arith.constant 0 : index
    %c0_4 = arith.constant 0 : index
    %3 = vector.load %arg3[%c0_3, %c0_4] : memref<1x32xf32, #tpu.memory_space<vmem>>, vector<1x32xf32>
    %4 = vector.broadcast %3 : vector<1x32xf32> to vector<32x32xf32>
    %5 = arith.addf %2, %4 : vector<32x32xf32>
    %cst_5 = arith.constant 0.000000e+00 : f32
    %6 = vector.broadcast %cst_5 : f32 to vector<32x32xf32>
    %7 = arith.maximumf %5, %6 : vector<32x32xf32>
    %c0_6 = arith.constant 0 : index
    %c0_7 = arith.constant 0 : index
    %8 = vector.load %arg4[%c0_6, %c0_7] : memref<32x128xf32, #tpu.memory_space<vmem>>, vector<32x128xf32>
    %cst_8 = arith.constant dense<0.000000e+00> : vector<32x128xf32>
    %9 = tpu.matmul %7, %8, %cst_8 {dimension_numbers = #tpu.dot_dimension_numbers<[1], [0], [0], [1], [0, 0, 1, 1], [], []>} : vector<32x32xf32>, vector<32x128xf32>, vector<32x128xf32> -> vector<32x128xf32>
    %c0_9 = arith.constant 0 : index
    %c0_10 = arith.constant 0 : index
    %10 = vector.load %arg5[%c0_9, %c0_10] : memref<1x128xf32, #tpu.memory_space<vmem>>, vector<1x128xf32>
    %11 = vector.broadcast %10 : vector<1x128xf32> to vector<32x128xf32>
    %12 = arith.addf %9, %11 : vector<32x128xf32>
    %c0_11 = arith.constant 0 : index
    %c0_12 = arith.constant 0 : index
    %13 = vector.load %arg6[%c0_11, %c0_12] : memref<32x128xf32, #tpu.memory_space<vmem>>, vector<32x128xf32>
    tpu.vector_store %arg6[%c0_11, %c0_12], %12 {strides = array<i32>} : memref<32x128xf32, #tpu.memory_space<vmem>>, vector<32x128xf32>,
    return
  }
  func.func @transform_0(%arg0: i32) -> (i32, i32) {
    %c0_i32 = arith.constant 0 : i32
    %c0_i32_0 = arith.constant 0 : i32
    return %arg0, %c0_i32 : i32, i32
  }
  func.func @transform_1(%arg0: i32) -> (i32, i32) {
    %c0_i32 = arith.constant 0 : i32
    %c0_i32_0 = arith.constant 0 : i32
    %c0_i32_1 = arith.constant 0 : i32
    return %c0_i32, %c0_i32_0 : i32, i32
  }
  func.func @transform_2(%arg0: i32) -> (i32, i32) {
    %c0_i32 = arith.constant 0 : i32
    %c0_i32_0 = arith.constant 0 : i32
    %c0_i32_1 = arith.constant 0 : i32
    return %c0_i32, %c0_i32_0 : i32, i32
  }
  func.func @transform_3(%arg0: i32) -> (i32, i32) {
    %c0_i32 = arith.constant 0 : i32
    %c0_i32_0 = arith.constant 0 : i32
    %c0_i32_1 = arith.constant 0 : i32
    return %c0_i32, %c0_i32_0 : i32, i32
  }
  func.func @transform_4(%arg0: i32) -> (i32, i32) {
    %c0_i32 = arith.constant 0 : i32
    %c0_i32_0 = arith.constant 0 : i32
    %c0_i32_1 = arith.constant 0 : i32
    return %c0_i32, %c0_i32_0 : i32, i32
  }
  func.func @transform_5(%arg0: i32) -> (i32, i32) {
    %c0_i32 = arith.constant 0 : i32
    %c0_i32_0 = arith.constant 0 : i32
    return %arg0, %c0_i32 : i32, i32
  }
}

</mosaic_0001>

<llo_original>
// kernel: tpu_custom_call.1
$region0: #{tpu_custom_call.1}
  #allocation0 [shape = 'u32[]', space=smem, size = 0x4, offset = 0x4, fixed_abs, tag = 'smem constant byte address 0x4 - core index']
  #allocation1 [shape = 'u32[144,128]{1,0:T(1,128)}', space=vmem, size = 0x12000, scoped, tag = 'internal scratch']
  %s0 = inlined_call_operand.vmem [shape: f32[64,16], index: 0, kind: input, shape index: {}]
  %s1 = inlined_call_operand.vmem [shape: f32[16,32], index: 1, kind: input, shape index: {}]
  %s2 = inlined_call_operand.vmem [shape: f32[1,32], index: 2, kind: input, shape index: {}]
  %s3 = inlined_call_operand.vmem [shape: f32[32,128], index: 3, kind: input, shape index: {}]
  %s4 = inlined_call_operand.vmem [shape: f32[1,128], index: 4, kind: input, shape index: {}]
  %s5 = inlined_call_operand.hbm [shape: f32[64,128], index: 5, kind: output, shape index: {}]
  %s6 = sld [smem:[#allocation0]]
  $region53: #{tpu_custom_call.1} parent=0
    _
  %s8 = ssub.s32 1, %s6
  %s9 = scalar_select 0, %s8, %s6
  $region1: #{tpu_custom_call.1} parent=0
    #allocation2 [shape = 'u8[32768]{0}', space=vmem, size = 0x8000, scoped, tag = 'output window, operand 0']
    #allocation3 [shape = 's32[2]{0}', space=sflag, size = 0x8, scoped, tag = 'scoped memory for tpu_custom_call.1']
    %10 = vsyncpa [#allocation3], 0
    %s11 = scalar_lea.sflag [#allocation3], 1
    %12 = vsyncpa %s11, 0
    loop: start=0, step=1, limit=4
    $region2: #{tpu_custom_call.1} parent=1 // loop_pre_header
      _
    $region3: #{tpu_custom_call.1} parent=1 // loop_header
      %s14 = sphi 0, %s18
      %p15 = scmp.ge.s32.totalorder %s14, 4
      %s24 = sphi 0, %s26
      %s27 = sphi 0, %s24
      %s28 = sphi 0, %s27
      %s44 = sphi 0, %s28
      %s48 = sphi 0, %s48
      %s50 = sphi 0, %s48
      %s51 = sphi 0, %s50
      %s65 = sphi 0, %s51
      %s69 = sphi 0, %s69
      %s71 = sphi 0, %s69
      %s72 = sphi 0, %s71
      %s86 = sphi 0, %s72
      %s90 = sphi 0, %s90
      %s92 = sphi 0, %s90
      %s93 = sphi 0, %s92
      %s107 = sphi 0, %s93
      %s111 = sphi 0, %s111
      %s113 = sphi 0, %s111
      %s114 = sphi 0, %s113
      %s128 = sphi 0, %s114
      %s134 = sphi 0, %s136
      %s137 = sphi 0, %s134
      %s138 = sphi 0, %s137
      %s154 = sphi 0, %s138
    $region4: #{tpu_custom_call.1} parent=1 // loop_header_branch
      %17 = sbr.rel (%p15) target = $region8
    $region5: #{tpu_custom_call.1} parent=1 // loop_body
      %s19 = ssub.s32 %s14, 1
      %s20 = ssub.s32 %s14, 2
      %s21 = sadd.s32 %s14, 1
      %s22 = ssub.s32 %s14, %s21
      %p23 = scmp.eq.s32.totalorder %s22, 0
      %s25 = sadd.s32 %s24, 1
      %s26 = scalar_select %p23, %s24, %s25
      %p29 = pneg %p23
      %p30 = scmp.eq.s32.totalorder %s14, 1
      %p31 = por %p29, %p30
      %p32 = scmp.ne.s32.totalorder %s24, %s27
      %p33 = scmp.eq.s32.totalorder %s14, 0
      %p34 = por %p32, %p33
      %p35 = scmp.ne.s32.totalorder %s24, %s27
      %p36 = scmp.eq.s32.totalorder %s19, 1
      %p37 = por %p35, %p36
      %p38 = scmp.ne.s32.totalorder %s27, %s28
      %p39 = scmp.eq.s32.totalorder %s19, 0
      %p40 = por %p38, %p39
      %p41 = scmp.ne.s32.totalorder %s27, %s28
      %p42 = scmp.eq.s32.totalorder %s20, 1
      %p43 = por %p41, %p42
      %p45 = scmp.ne.s32.totalorder %s28, %s44
      %p46 = scmp.eq.s32.totalorder %s20, 0
      %p47 = por %p45, %p46
      %s49 = sadd.s32 %s48, 1
      %p52 = scmp.eq.s32.totalorder %s14, 1
      %p53 = scmp.ne.s32.totalorder %s48, %s50
      %p54 = scmp.eq.s32.totalorder %s14, 0
      %p55 = por %p53, %p54
      %p56 = scmp.ne.s32.totalorder %s48, %s50
      %p57 = scmp.eq.s32.totalorder %s19, 1
      %p58 = por %p56, %p57
      %p59 = scmp.ne.s32.totalorder %s50, %s51
      %p60 = scmp.eq.s32.totalorder %s19, 0
      %p61 = por %p59, %p60
      %p62 = scmp.ne.s32.totalorder %s50, %s51
      %p63 = scmp.eq.s32.totalorder %s20, 1
      %p64 = por %p62, %p63
      %p66 = scmp.ne.s32.totalorder %s51, %s65
      %p67 = scmp.eq.s32.totalorder %s20, 0
      %p68 = por %p66, %p67
      %s70 = sadd.s32 %s69, 1
      %p73 = scmp.eq.s32.totalorder %s14, 1
      %p74 = scmp.ne.s32.totalorder %s69, %s71
      %p75 = scmp.eq.s32.totalorder %s14, 0
      %p76 = por %p74, %p75
      %p77 = scmp.ne.s32.totalorder %s69, %s71
      %p78 = scmp.eq.s32.totalorder %s19, 1
      %p79 = por %p77, %p78
      %p80 = scmp.ne.s32.totalorder %s71, %s72
      %p81 = scmp.eq.s32.totalorder %s19, 0
      %p82 = por %p80, %p81
      %p83 = scmp.ne.s32.totalorder %s71, %s72
      %p84 = scmp.eq.s32.totalorder %s20, 1
      %p85 = por %p83, %p84
      %p87 = scmp.ne.s32.totalorder %s72, %s86
      %p88 = scmp.eq.s32.totalorder %s20, 0
      %p89 = por %p87, %p88
      %s91 = sadd.s32 %s90, 1
      %p94 = scmp.eq.s32.totalorder %s14, 1
      %p95 = scmp.ne.s32.totalorder %s90, %s92
      %p96 = scmp.eq.s32.totalorder %s14, 0
      %p97 = por %p95, %p96
      %p98 = scmp.ne.s32.totalorder %s90, %s92
      %p99 = scmp.eq.s32.totalorder %s19, 1
      %p100 = por %p98, %p99
      %p101 = scmp.ne.s32.totalorder %s92, %s93
      %p102 = scmp.eq.s32.totalorder %s19, 0
      %p103 = por %p101, %p102
      %p104 = scmp.ne.s32.totalorder %s92, %s93
      %p105 = scmp.eq.s32.totalorder %s20, 1
      %p106 = por %p104, %p105
      %p108 = scmp.ne.s32.totalorder %s93, %s107
      %p109 = scmp.eq.s32.totalorder %s20, 0
      %p110 = por %p108, %p109
      %s112 = sadd.s32 %s111, 1
      %p115 = scmp.eq.s32.totalorder %s14, 1
      %p116 = scmp.ne.s32.totalorder %s111, %s113
      %p117 = scmp.eq.s32.totalorder %s14, 0
      %p118 = por %p116, %p117
      %p119 = scmp.ne.s32.totalorder %s111, %s113
      %p120 = scmp.eq.s32.totalorder %s19, 1
      %p121 = por %p119, %p120
      %p122 = scmp.ne.s32.totalorder %s113, %s114
      %p123 = scmp.eq.s32.totalorder %s19, 0
      %p124 = por %p122, %p123
      %p125 = scmp.ne.s32.totalorder %s113, %s114
      %p126 = scmp.eq.s32.totalorder %s20, 1
      %p127 = por %p125, %p126
      %p129 = scmp.ne.s32.totalorder %s114, %s128
      %p130 = scmp.eq.s32.totalorder %s20, 0
      %p131 = por %p129, %p130
      %s132 = ssub.s32 %s14, %s21
      %p133 = scmp.eq.s32.totalorder %s132, 0
      %s135 = sadd.s32 %s134, 1
      %s136 = scalar_select %p133, %s134, %s135
      %p139 = pneg %p133
      %p140 = scmp.eq.s32.totalorder %s14, 1
      %p141 = por %p139, %p140
      %p142 = scmp.ne.s32.totalorder %s134, %s137
      %p143 = scmp.eq.s32.totalorder %s14, 0
      %p144 = por %p142, %p143
      %p145 = scmp.ne.s32.totalorder %s134, %s137
      %p146 = scmp.eq.s32.totalorder %s19, 1
      %p147 = por %p145, %p146
      %p148 = scmp.ne.s32.totalorder %s137, %s138
      %p149 = scmp.eq.s32.totalorder %s19, 0
      %p150 = por %p148, %p149
      %p151 = scmp.ne.s32.totalorder %s137, %s138
      %p152 = scmp.eq.s32.totalorder %s20, 1
      %p153 = por %p151, %p152
      %p155 = scmp.ne.s32.totalorder %s138, %s154
      %p156 = scmp.eq.s32.totalorder %s20, 0
      %p157 = por %p155, %p156
      %p158 = scmp.le.s32.totalorder 1, %s14
      %p159 = scmp.lt.s32.totalorder %s14, 3
      %p160 = pnand %p158, %p159
      %p161 = pneg %p160
      // Predicated region
      $region9: #{tpu_custom_call.1} parent=5 // pred_check
        _
      $region10: #{tpu_custom_call.1} parent=5 // pred_check_branch
        %163 = sbr.rel (%p160) target = $region12
      $region11: #{tpu_custom_call.1} parent=5 // pred_region
        %s164 = ssub.s32 %s14, 1
        // Predicated region
        $region13: #{tpu_custom_call.1} parent=11 // pred_check
          %p165 = pneg %p61
        $region14: #{tpu_custom_call.1} parent=11 // pred_check_branch
          %167 = sbr.rel (%p165) target = $region16
        $region15: #{tpu_custom_call.1} parent=11 // pred_region
          _
        $region16: #{tpu_custom_call.1} parent=11 // pred_fallthru
          _
        // Predicated region
        $region17: #{tpu_custom_call.1} parent=11 // pred_check
          %p168 = pneg %p82
        $region18: #{tpu_custom_call.1} parent=11 // pred_check_branch
          %170 = sbr.rel (%p168) target = $region20
        $region19: #{tpu_custom_call.1} parent=11 // pred_region
          _
        $region20: #{tpu_custom_call.1} parent=11 // pred_fallthru
          _
        // Predicated region
        $region21: #{tpu_custom_call.1} parent=11 // pred_check
          %p171 = pneg %p103
        $region22: #{tpu_custom_call.1} parent=11 // pred_check_branch
          %173 = sbr.rel (%p171) target = $region24
        $region23: #{tpu_custom_call.1} parent=11 // pred_region
          _
        $region24: #{tpu_custom_call.1} parent=11 // pred_fallthru
          _
        // Predicated region
        $region25: #{tpu_custom_call.1} parent=11 // pred_check
          %p174 = pneg %p124
        $region26: #{tpu_custom_call.1} parent=11 // pred_check_branch
          %176 = sbr.rel (%p174) target = $region28
        $region27: #{tpu_custom_call.1} parent=11 // pred_region
          _
        $region28: #{tpu_custom_call.1} parent=11 // pred_fallthru
          _
      $region12: #{tpu_custom_call.1} parent=5 // pred_fallthru
        _
      %p177 = scmp.lt.s32.totalorder %s14, 2
      // Predicated region
      $region29: #{tpu_custom_call.1} parent=5 // pred_check
        %p178 = pneg %p177
      $region30: #{tpu_custom_call.1} parent=5 // pred_check_branch
        %180 = sbr.rel (%p178) target = $region32
      $region31: #{tpu_custom_call.1} parent=5 // pred_region
        // Predicated region
        $region33: #{tpu_custom_call.1} parent=31 // pred_check
          %p181 = pneg %p34
        $region34: #{tpu_custom_call.1} parent=31 // pred_check_branch
          %183 = sbr.rel (%p181) target = $region36
        $region35: #{tpu_custom_call.1} parent=31 // pred_region
          %s184 = smul.u32 4, %s14
          %p185 = scmp.lt.s32.totalorder %s184, 7
          %s186 = scalar_select %p185, %s184, 7
          %s187 = smul.addr %s186, 8
          %s188 = scalar_lea.vmem %s0, %s187
          %s189 = smul.u32 4, %s14
        $region36: #{tpu_custom_call.1} parent=31 // pred_fallthru
          _
      $region32: #{tpu_custom_call.1} parent=5 // pred_fallthru
        _
      %p190 = scmp.le.s32.totalorder 1, %s14
      %p191 = scmp.lt.s32.totalorder %s14, 3
      %p192 = pnand %p190, %p191
      %p193 = pneg %p192
      // Predicated region
      $region37: #{tpu_custom_call.1} parent=5 // pred_check
        _
      $region38: #{tpu_custom_call.1} parent=5 // pred_check_branch
        %195 = sbr.rel (%p192) target = $region40
      $region39: #{tpu_custom_call.1} parent=5 // pred_region
        %s196 = ssub.s32 %s14, 1
        %s197 = smul.u32 4, %s19
        %p198 = scmp.lt.s32.totalorder %s197, 7
        %s199 = scalar_select %p198, %s197, 7
        %s200 = smul.addr %s199, 8
        %s201 = scalar_lea.vmem %s0, %s200
        %p202 = pneg %p40
        %p203 = pneg %p37
        %p204 = pneg %p61
        %p205 = pneg %p58
        %p206 = pneg %p82
        %p207 = pneg %p79
        %p208 = pneg %p103
        %p209 = pneg %p100
        %p210 = pneg %p124
        %p211 = pneg %p121
        %p212 = pneg %p150
        %p213 = pneg %p147
        %s214 = sand.u32 %s137, 1
        %s215 = scalar_lea.sflag [#allocation3], %s214
        %s216 = sand.u32 %s137, 1
        %s217 = smul.addr %s216, 32
        %s218 = scalar_lea.vmem [#allocation2], %s217
        %s219 = smul.u32 4, %s19
        %p220 = scmp.lt.s32.totalorder %s219, 7
        %s221 = scalar_select %p220, %s219, 7
        %s222 = smul.addr %s221, 8
        %s223 = scalar_lea.vmem %s0, %s222
        %s224 = smul.u32 4, %s19
        %s225 = smul.u32 4, %s19
        %v226 = vld [vmem:[%s223] sm:$0xff]
        %v227 = vld [vmem:[%s223 + $0x8] sm:$0xff]
        %v228 = vld [vmem:[%s223 + $0x10] sm:$0xff]
        %v229 = vld [vmem:[%s223 + $0x18] sm:$0xff]
        %v230 = vld [vmem:[%s1] sm:$0xff]
        %v231 = vld [vmem:[%s1 + $0x8] sm:$0xff]
        %v232 = vld [vmem:[%s2] sm:$0x1]
        %v234 = vlaneseq
        %v235 = vshrl.u32 %v234, 7
        %v236 = vsub.s32 0, %v235
        %v237 = vrot.slane %v232, %v236
        %vm239 = vcmask 130048
        %v241 = vsel %vm239, %v226, 0
        %v244 = vsel %vm239, %v227, 0
        %v247 = vsel %vm239, %v228, 0
        %v250 = vsel %vm239, %v229, 0
        %252 = vmatprep.subr.mxu0 0.0
        %253 = vmatpush1.msra.mxu0 %v230
        %254 = vmatprep.subr.mxu0 0.0
        %255 = vmatpush1.msra.mxu0 %v231
        %256 = vmatprep.subr.mxu0 0.0
        %257 = vmatpush1.msra.mxu0 0.0
        %258 = vmatprep.subr.mxu0 0.0
        %259 = vmatpush1.msra.mxu0 0.0
        %260 = vmatprep.subr.mxu0 0.0
        %261 = vmatpush1.msra.mxu0 0.0
        %262 = vmatprep.subr.mxu0 0.0
        %263 = vmatpush1.msra.mxu0 0.0
        %264 = vmatprep.subr.mxu0 0.0
        %265 = vmatpush1.msra.mxu0 0.0
        %266 = vmatprep.subr.mxu0 0.0
        %267 = vmatpush1.msra.mxu0 0.0
        %268 = vmatprep.subr.mxu0 0.0
        %269 = vmatpush1.msra.mxu0 0.0
        %270 = vmatprep.subr.mxu0 0.0
        %271 = vmatpush1.msra.mxu0 0.0
        %272 = vmatprep.subr.mxu0 0.0
        %273 = vmatpush1.msra.mxu0 0.0
        %274 = vmatprep.subr.mxu0 0.0
        %275 = vmatpush1.msra.mxu0 0.0
        %276 = vmatprep.subr.mxu0 0.0
        %277 = vmatpush1.msra.mxu0 0.0
        %278 = vmatprep.subr.mxu0 0.0
        %279 = vmatpush1.msra.mxu0 0.0
        %280 = vmatprep.subr.mxu0 0.0
        %281 = vmatpush1.msra.mxu0 0.0
        %282 = vmatprep.subr.mxu0 0.0
        %283 = vmatpush1.msra.mxu0 0.0
        %284 = vmatprep.subr.mxu0 0.0
        %285 = vmatpush1.msra.mxu0 0.0
        %286 = vmatprep.subr.mxu0 0.0
        %287 = vmatpush1.msra.mxu0 0.0
        %288 = vmatprep.subr.mxu0 0.0
        %289 = vmatpush1.msra.mxu0 0.0
        %290 = vmatprep.subr.mxu0 0.0
        %291 = vmatpush1.msra.mxu0 0.0
        %292 = vmatprep.subr.mxu0 0.0
        %293 = vmatpush1.msra.mxu0 0.0
        %294 = vmatprep.subr.mxu0 0.0
        %295 = vmatpush1.msra.mxu0 0.0
        %296 = vmatprep.subr.mxu0 0.0
        %297 = vmatpush1.msra.mxu0 0.0
        %298 = vmatprep.subr.mxu0 0.0
        %299 = vmatpush1.msra.mxu0 0.0
        %300 = vmatprep.subr.mxu0 0.0
        %301 = vmatpush1.msra.mxu0 0.0
        %302 = vmatprep.subr.mxu0 0.0
        %303 = vmatpush1.msra.mxu0 0.0
        %304 = vmatprep.subr.mxu0 0.0
        %305 = vmatpush1.msra.mxu0 0.0
        %306 = vmatprep.subr.mxu0 0.0
        %307 = vmatpush1.msra.mxu0 0.0
        %308 = vmatprep.subr.mxu0 0.0
        %309 = vmatpush1.msra.mxu0 0.0
        %310 = vmatprep.subr.mxu0 0.0
        %311 = vmatpush1.msra.mxu0 0.0
        %312 = vmatprep.subr.mxu0 0.0
        %313 = vmatpush1.msra.mxu0 0.0
        %314 = vmatprep.subr.mxu0 0.0
        %315 = vmatpush1.msra.mxu0 0.0
        %316 = vmatprep.mubr.f32.mxu0 0.0
        %317 = vmatmul.mubr.f32.gmra.mrb[0].mxu0 %v241
        %v318 = vpop.f32.mrb[0].mxu0
        %v319 = vadd.f32 %v237, %v318
        %v320 = vpop.f32.mrb[0].mxu0
        %321 = vmatprep.mubr.f32.mxu0 0.0
        %322 = vmatmul.mubr.f32.gmra.mrb[0].mxu0 %v244
        %v323 = vpop.f32.mrb[0].mxu0
        %v324 = vadd.f32 %v237, %v323
        %v325 = vpop.f32.mrb[0].mxu0
        %326 = vmatprep.mubr.f32.mxu0 0.0
        %327 = vmatmul.mubr.f32.gmra.mrb[0].mxu0 %v247
        %v328 = vpop.f32.mrb[0].mxu0
        %v329 = vadd.f32 %v237, %v328
        %v330 = vpop.f32.mrb[0].mxu0
        %331 = vmatprep.mubr.f32.mxu0 0.0
        %332 = vmatmul.mubr.f32.gmra.mrb[0].mxu0 %v250
        %v333 = vpop.f32.mrb[0].mxu0
        %v334 = vadd.f32 %v237, %v333
        %v335 = vpop.f32.mrb[0].mxu0
        %336 = vdwg.mxu0
        %v337 = vmax.f32 %v319, 0.0
        %v338 = vmax.f32 %v324, 0.0
        %v339 = vmax.f32 %v329, 0.0
        %v340 = vmax.f32 %v334, 0.0
        %v341 = vld [vmem:[%s3] sm:$0xff]
        %v342 = vld [vmem:[%s3 + $0x8] sm:$0xff]
        %v343 = vld [vmem:[%s3 + $0x10] sm:$0xff]
        %v344 = vld [vmem:[%s3 + $0x18] sm:$0xff]
        %v345 = vld [vmem:[%s4] sm:$0x1]
        %v347 = vlaneseq
        %v348 = vshrl.u32 %v347, 7
        %v349 = vsub.s32 0, %v348
        %v350 = vrot.slane %v345, %v349
        %vm352 = vcmask 261120
        %v354 = vsel %vm352, %v337, 0
        %v357 = vsel %vm352, %v338, 0
        %v360 = vsel %vm352, %v339, 0
        %v363 = vsel %vm352, %v340, 0
        %365 = vmatprep.subr.mxu0 0.0
        %366 = vmatpush1.msra.mxu0 %v341
        %367 = vmatprep.subr.mxu0 0.0
        %368 = vmatpush1.msra.mxu0 %v342
        %369 = vmatprep.subr.mxu0 0.0
        %370 = vmatpush1.msra.mxu0 %v343
        %371 = vmatprep.subr.mxu0 0.0
        %372 = vmatpush1.msra.mxu0 %v344
        %373 = vmatprep.subr.mxu0 0.0
        %374 = vmatpush1.msra.mxu0 0.0
        %375 = vmatprep.subr.mxu0 0.0
        %376 = vmatpush1.msra.mxu0 0.0
        %377 = vmatprep.subr.mxu0 0.0
        %378 = vmatpush1.msra.mxu0 0.0
        %379 = vmatprep.subr.mxu0 0.0
        %380 = vmatpush1.msra.mxu0 0.0
        %381 = vmatprep.subr.mxu0 0.0
        %382 = vmatpush1.msra.mxu0 0.0
        %383 = vmatprep.subr.mxu0 0.0
        %384 = vmatpush1.msra.mxu0 0.0
        %385 = vmatprep.subr.mxu0 0.0
        %386 = vmatpush1.msra.mxu0 0.0
        %387 = vmatprep.subr.mxu0 0.0
        %388 = vmatpush1.msra.mxu0 0.0
        %389 = vmatprep.subr.mxu0 0.0
        %390 = vmatpush1.msra.mxu0 0.0
        %391 = vmatprep.subr.mxu0 0.0
        %392 = vmatpush1.msra.mxu0 0.0
        %393 = vmatprep.subr.mxu0 0.0
        %394 = vmatpush1.msra.mxu0 0.0
        %395 = vmatprep.subr.mxu0 0.0
        %396 = vmatpush1.msra.mxu0 0.0
        %397 = vmatprep.subr.mxu0 0.0
        %398 = vmatpush1.msra.mxu0 0.0
        %399 = vmatprep.subr.mxu0 0.0
        %400 = vmatpush1.msra.mxu0 0.0
        %401 = vmatprep.subr.mxu0 0.0
        %402 = vmatpush1.msra.mxu0 0.0
        %403 = vmatprep.subr.mxu0 0.0
        %404 = vmatpush1.msra.mxu0 0.0
        %405 = vmatprep.subr.mxu0 0.0
        %406 = vmatpush1.msra.mxu0 0.0
        %407 = vmatprep.subr.mxu0 0.0
        %408 = vmatpush1.msra.mxu0 0.0
        %409 = vmatprep.subr.mxu0 0.0
        %410 = vmatpush1.msra.mxu0 0.0
        %411 = vmatprep.subr.mxu0 0.0
        %412 = vmatpush1.msra.mxu0 0.0
        %413 = vmatprep.subr.mxu0 0.0
        %414 = vmatpush1.msra.mxu0 0.0
        %415 = vmatprep.subr.mxu0 0.0
        %416 = vmatpush1.msra.mxu0 0.0
        %417 = vmatprep.subr.mxu0 0.0
        %418 = vmatpush1.msra.mxu0 0.0
        %419 = vmatprep.subr.mxu0 0.0
        %420 = vmatpush1.msra.mxu0 0.0
        %421 = vmatprep.subr.mxu0 0.0
        %422 = vmatpush1.msra.mxu0 0.0
        %423 = vmatprep.subr.mxu0 0.0
        %424 = vmatpush1.msra.mxu0 0.0
        %425 = vmatprep.subr.mxu0 0.0
        %426 = vmatpush1.msra.mxu0 0.0
        %427 = vmatprep.subr.mxu0 0.0
        %428 = vmatpush1.msra.mxu0 0.0
        %429 = vmatprep.mubr.f32.mxu0 0.0
        %430 = vmatmul.mubr.f32.gmra.mrb[0].mxu0 %v354
        %v431 = vpop.f32.mrb[0].mxu0
        %v432 = vadd.f32 %v350, %v431
        %v433 = vpop.f32.mrb[0].mxu0
        %434 = vmatprep.mubr.f32.mxu0 0.0
        %435 = vmatmul.mubr.f32.gmra.mrb[0].mxu0 %v357
        %v436 = vpop.f32.mrb[0].mxu0
        %v437 = vadd.f32 %v350, %v436
        %v438 = vpop.f32.mrb[0].mxu0
        %439 = vmatprep.mubr.f32.mxu0 0.0
        %440 = vmatmul.mubr.f32.gmra.mrb[0].mxu0 %v360
        %v441 = vpop.f32.mrb[0].mxu0
        %v442 = vadd.f32 %v350, %v441
        %v443 = vpop.f32.mrb[0].mxu0
        %444 = vmatprep.mubr.f32.mxu0 0.0
        %445 = vmatmul.mubr.f32.gmra.mrb[0].mxu0 %v363
        %v446 = vpop.f32.mrb[0].mxu0
        %v447 = vadd.f32 %v350, %v446
        %v448 = vpop.f32.mrb[0].mxu0
        %449 = vdwg.mxu0
        %450 = vst [vmem:[%s218] sm:$0xff] %v432
        %451 = vst [vmem:[%s218 + $0x8] sm:$0xff] %v437
        %452 = vst [vmem:[%s218 + $0x10] sm:$0xff] %v442
        %453 = vst [vmem:[%s218 + $0x18] sm:$0xff] %v447
        %s454 = sand.u32 %s137, 1
        %s455 = scalar_lea.sflag [#allocation3], %s454
        %s456 = sand.u32 %s137, 1
        %s457 = smul.addr %s456, 32
        %s458 = scalar_lea.vmem [#allocation2], %s457
        // Predicated region
        $region41: #{tpu_custom_call.1} parent=39 // pred_check
          %p459 = pneg %p147
        $region42: #{tpu_custom_call.1} parent=39 // pred_check_branch
          %461 = sbr.rel (%p459) target = $region44
        $region43: #{tpu_custom_call.1} parent=39 // pred_region
          %s462 = smul.u32 4, %s19
          %s464 = ssub.s32 512, 512
          %465 = vsyncadd %s455, %s464
          %s466 = smul.addr %s462, 128
          %s467 = scalar_lea.hbm %s5, %s466
          %s468 = sshll.u32 %s458, 4
          %s469 = int_to_ptr.vmem [resolvable:$true] %s468
          %474 = dma.vmem_to_hbm [thread:$0]  %s469, 512, %s467, %s455, 128, 128, 8
        $region44: #{tpu_custom_call.1} parent=39 // pred_fallthru
          _
      $region40: #{tpu_custom_call.1} parent=5 // pred_fallthru
        _
      %p475 = scmp.le.s32.totalorder 2, %s14
      // Predicated region
      $region45: #{tpu_custom_call.1} parent=5 // pred_check
        %p476 = pneg %p475
      $region46: #{tpu_custom_call.1} parent=5 // pred_check_branch
        %478 = sbr.rel (%p476) target = $region48
      $region47: #{tpu_custom_call.1} parent=5 // pred_region
        %s479 = ssub.s32 %s14, 2
        // Predicated region
        $region49: #{tpu_custom_call.1} parent=47 // pred_check
          %p480 = pneg %p153
        $region50: #{tpu_custom_call.1} parent=47 // pred_check_branch
          %482 = sbr.rel (%p480) target = $region52
        $region51: #{tpu_custom_call.1} parent=47 // pred_region
          %s483 = sand.u32 %s138, 1
          %s484 = scalar_lea.sflag [#allocation3], %s483
          %s485 = sand.u32 %s138, 1
          %s486 = smul.addr %s485, 32
          %s487 = scalar_lea.vmem [#allocation2], %s486
          %488 = dma.done %s484, 512
        $region52: #{tpu_custom_call.1} parent=47 // pred_fallthru
          _
      $region48: #{tpu_custom_call.1} parent=5 // pred_fallthru
        _
    $region6: #{tpu_custom_call.1} parent=1 // loop_footer
      %s18 = sadd.s32 1, %s14
    $region7: #{tpu_custom_call.1} parent=1 // loop_footer_branch
      %13 = sbr.rel target = $region3
    $region8: #{tpu_custom_call.1} parent=1 // loop_exit
      _
    %489 = vsyncpa [#allocation3], 1
    %s490 = scalar_lea.sflag [#allocation3], 1
    %491 = vsyncpa %s490, 1

</llo_original>
